<compile_context>
chip_gen: v7x
topology: tpu7x:2x2x1
jax: 0.10.0
libtpu: 0.0.40
codegen_flags: <defaults>
</compile_context>

<pallas_src>
import functools
import math

import jax
import jax.numpy as jnp
from jax.experimental import pallas as pl
from jax.experimental.pallas import tpu as pltpu

_HEAD_PAD = 8  # lane-padded width of the 1-wide value head (masked vst, 16x less writeback than 128)


def _critic_kernel(x_ref,
                   w1_ref, b1_ref,
                   w2_ref, b2_ref,
                   w3_ref, b3_ref,
                   w4_ref, b4_ref,
                   wv_ref, bv_ref,
                   out_ref):
    def linear(h_bf16, w_ref, b_ref):
        # MXU matmul in bf16 with f32 accumulation; bias-add in f32 on the VPU.
        y = jnp.dot(h_bf16, w_ref[...], preferred_element_type=jnp.float32)
        return y + b_ref[...]           # (1, out) broadcasts over the batch tile

    def relu_bf16(y):
        # ReLU + downcast in one VPU pass; the next matmul consumes bf16 directly.
        return jnp.maximum(y, 0.0).astype(jnp.bfloat16)

    # TODO(synk): nn.Dropout(0.1) is eval-mode identity here; no train-mode RNG mask.
    h = x_ref[...]                                   # bf16 (tile_b, state_dim)
    h = relu_bf16(linear(h, w1_ref, b1_ref))
    h = relu_bf16(linear(h, w2_ref, b2_ref))
    h = relu_bf16(linear(h, w3_ref, b3_ref))
    h = relu_bf16(linear(h, w4_ref, b4_ref))

    v = linear(h, wv_ref, bv_ref)                    # (tile_b, _HEAD_PAD) f32
    out_ref[...] = jnp.clip(v, -100.0, 100.0)


def _round_up(x, m):
    return (x + m - 1) // m * m


def _tensorcores_per_chip():
    # v7x has 2 TensorCores per chip; v5e/v6e have 1. Fall back to 1 if unknown.
    try:
        kind = jax.devices()[0].device_kind.lower()
    except Exception:
        return 1
    return 2 if "v7" in kind else 1


_TC_PER_CHIP = _tensorcores_per_chip()


def _pick_tile_b(batch):
    """256-512-row tiles for large batches; one tile for small; >=2 tiles on v7x."""
    padded = _round_up(batch, 8)
    if padded <= 512:
        tile_b = padded
    else:
        n_tiles = -(-padded // 512)                       # ceil
        tile_b = _round_up(-(-padded // n_tiles), 8)      # minimize pad waste
    # v7x megacore: make sure the "parallel" batch axis has >= 2 grid steps
    # when there is enough work to amortize the extra step overhead.
    if _TC_PER_CHIP >= 2 and padded // tile_b < 2 and padded >= 64:
        tile_b = _round_up(-(-padded // 2), 8)
    return tile_b


@functools.partial(jax.jit, static_argnames=("tile_b",))
def _critic_forward_impl(state, params, tile_b):
    batch, state_dim = state.shape
    hidden = params["w1"].shape[1]
    padded_b = _round_up(batch, tile_b)

    # Cast once in the wrapper: halves the x DMA bytes and the kernel consumes
    # bf16 directly (NOTE: bf16 operands vs the f32 PyTorch reference; f32
    # accumulation keeps the 5-layer relative error small, ~<1e-2).
    x = state.astype(jnp.bfloat16)
    if padded_b != batch:
        x = jnp.pad(x, ((0, padded_b - batch), (0, 0)))

    args = (
        x,
        params["w1"], params["b1"],
        params["w2"], params["b2"],
        params["w3"], params["b3"],
        params["w4"], params["b4"],
        params["wv"], params["bv"],
    )

    resident = lambda i: (0, 0)  # weights / biases stay VMEM-resident across grid steps
    in_specs = [pl.BlockSpec((tile_b, state_dim), lambda i: (i, 0))]
    for a in args[1:]:
        # Constant index_map => single DMA ever; single-buffer to halve weight VMEM.
        in_specs.append(pl.BlockSpec(a.shape, resident, pipeline_mode=pl.Buffered(1)))

    weight_bytes = sum(math.prod(a.shape) * a.dtype.itemsize for a in args[1:])
    io_bytes = padded_b * (state_dim * 2 + _HEAD_PAD * 4)
    cost = pl.CostEstimate(
        flops=2 * padded_b * hidden * (state_dim + 3 * hidden + _HEAD_PAD),
        transcendentals=0,
        bytes_accessed=weight_bytes + io_bytes,
    )

    # Explicit VMEM budget: single-buffered weights + double-buffered I/O tiles
    # + f32/bf16 activation slabs, with 2x headroom; clamped to the default
    # scoped limit so it is portable across v5e/v6e (128 MiB) and v7x (64 MiB).
    act_bytes = tile_b * (2 * state_dim * 2 + 2 * _HEAD_PAD * 4 + hidden * 12)
    vmem_limit = int(min(32 << 20, max(8 << 20, 2 * (weight_bytes + act_bytes))))

    out = pl.pallas_call(
        _critic_kernel,
        out_shape=jax.ShapeDtypeStruct((padded_b, _HEAD_PAD), jnp.float32),
        grid_spec=pltpu.PrefetchScalarGridSpec(
            num_scalar_prefetch=0,
            grid=(padded_b // tile_b,),
            in_specs=in_specs,
            out_specs=pl.BlockSpec((tile_b, _HEAD_PAD), lambda i: (i, 0)),
        ),
        compiler_params=pltpu.CompilerParams(
            dimension_semantics=("parallel",),
            vmem_limit_bytes=vmem_limit),
        cost_estimate=cost,
    )(*args)

    value = out[:batch, :1]
    # Whole-tensor NaN/Inf guard (matches the PyTorch branch), in the wrapper so
    # the XLU reduction is off the kernel's critical path.  Slice the padded
    # rows off BEFORE the guard so padding can never falsely zero the output.
    # TODO(synk): the PyTorch warning print on nan/inf is not reproduced.
    bad = jnp.any(jnp.isnan(value)) | jnp.any(jnp.isinf(value))
    return jnp.where(bad, jnp.zeros_like(value), value)


def critic_forward(state, params, tile_b=None):
    """state: (B, state_dim) f32.  Returns value: (B, 1) f32."""
    if tile_b is None:
        tile_b = _pick_tile_b(state.shape[0])
    return _critic_forward_impl(state, params, tile_b)


def init_params(key, state_dim, hidden_dim):
    """PyTorch-style uniform fan-in init.  Weights transposed to (in, out) and
    cast to bf16 for the MXU; biases kept f32.  value_head padded to _HEAD_PAD lanes."""
    def linear_init(k, fan_in, fan_out):
        kw, kb = jax.random.split(k)
        bound = 1.0 / float(fan_in) ** 0.5
        w = jax.random.uniform(kw, (fan_in, fan_out), jnp.float32, -bound, bound)
        b = jax.random.uniform(kb, (1, fan_out), jnp.float32, -bound, bound)
        return w.astype(jnp.bfloat16), b

    keys = jax.random.split(key, 5)
    w1, b1 = linear_init(keys[0], state_dim, hidden_dim)
    w2, b2 = linear_init(keys[1], hidden_dim, hidden_dim)
    w3, b3 = linear_init(keys[2], hidden_dim, hidden_dim)
    w4, b4 = linear_init(keys[3], hidden_dim, hidden_dim)
    wv, bv = linear_init(keys[4], hidden_dim, 1)
    # Pad the 1-wide value head to a small lane slab (zeros in the pad columns).
    wv = jnp.pad(wv, ((0, 0), (0, _HEAD_PAD - 1)))
    bv = jnp.pad(bv, ((0, 0), (0, _HEAD_PAD - 1)))
    return dict(w1=w1, b1=b1, w2=w2, b2=b2, w3=w3, b3=b3, w4=w4, b4=b4,
                wv=wv, bv=bv)


if __name__ == "__main__":
    key = jax.random.PRNGKey(0)
    k_params, k_state = jax.random.split(key)

    # Small demo shapes consistent with the module (hidden_dim kept MXU/lane
    # friendly at 128; the PyTorch default of 512 works identically).
    batch, state_dim, hidden_dim = 8, 16, 128
    params = init_params(k_params, state_dim, hidden_dim)
    state = jax.random.normal(k_state, (batch, state_dim), jnp.float32)

    value = critic_forward(state, params)
    jax.block_until_ready(value)

    assert value.shape == (batch, 1)
    assert bool(jnp.all(jnp.isfinite(value)))
    assert bool(jnp.all(value >= -100.0) & jnp.all(value <= 100.0))

    print("KERNEL_OK")
</pallas_src>

<mosaic_0001>
module attributes {stable_mosaic.version = 11 : i64} {
  func.func @_critic_kernel(%arg0: i32, %arg1: memref<8x16xbf16, #tpu.memory_space<vmem>>, %arg2: memref<16x128xbf16, #tpu.memory_space<vmem>>, %arg3: memref<1x128xf32, #tpu.memory_space<vmem>>, %arg4: memref<128x128xbf16, #tpu.memory_space<vmem>>, %arg5: memref<1x128xf32, #tpu.memory_space<vmem>>, %arg6: memref<128x128xbf16, #tpu.memory_space<vmem>>, %arg7: memref<1x128xf32, #tpu.memory_space<vmem>>, %arg8: memref<128x128xbf16, #tpu.memory_space<vmem>>, %arg9: memref<1x128xf32, #tpu.memory_space<vmem>>, %arg10: memref<128x8xbf16, #tpu.memory_space<vmem>>, %arg11: memref<1x8xf32, #tpu.memory_space<vmem>>, %arg12: memref<8x8xf32, #tpu.memory_space<vmem>>) attributes {dimension_semantics = [#tpu.dimension_semantics<parallel>], iteration_bounds = array<i64: 1>, scalar_prefetch = 0 : i64, scratch_operands = 0 : i64, tpu.core_type = #tpu.core_type<tc>, window_params = [{transform_indices = @transform_0, window_bounds = array<i64: 8, 16>}, {pipeline_mode = #tpu.pipeline_mode<synchronous>, transform_indices = @transform_1, window_bounds = array<i64: 16, 128>}, {pipeline_mode = #tpu.pipeline_mode<synchronous>, transform_indices = @transform_2, window_bounds = array<i64: 1, 128>}, {pipeline_mode = #tpu.pipeline_mode<synchronous>, transform_indices = @transform_3, window_bounds = array<i64: 128, 128>}, {pipeline_mode = #tpu.pipeline_mode<synchronous>, transform_indices = @transform_4, window_bounds = array<i64: 1, 128>}, {pipeline_mode = #tpu.pipeline_mode<synchronous>, transform_indices = @transform_5, window_bounds = array<i64: 128, 128>}, {pipeline_mode = #tpu.pipeline_mode<synchronous>, transform_indices = @transform_6, window_bounds = array<i64: 1, 128>}, {pipeline_mode = #tpu.pipeline_mode<synchronous>, transform_indices = @transform_7, window_bounds = array<i64: 128, 128>}, {pipeline_mode = #tpu.pipeline_mode<synchronous>, transform_indices = @transform_8, window_bounds = array<i64: 1, 128>}, {pipeline_mode = #tpu.pipeline_mode<synchronous>, transform_indices = @transform_9, window_bounds = array<i64: 128, 8>}, {pipeline_mode = #tpu.pipeline_mode<synchronous>, transform_indices = @transform_10, window_bounds = array<i64: 1, 8>}, {transform_indices = @transform_11, window_bounds = array<i64: 8, 8>}]} {
    %c0 = arith.constant 0 : index
    %c0_0 = arith.constant 0 : index
    %0 = vector.load %arg1[%c0, %c0_0] : memref<8x16xbf16, #tpu.memory_space<vmem>>, vector<8x16xbf16>
    %c0_1 = arith.constant 0 : index
    %c0_2 = arith.constant 0 : index
    %1 = vector.load %arg2[%c0_1, %c0_2] : memref<16x128xbf16, #tpu.memory_space<vmem>>, vector<16x128xbf16>
    %cst = arith.constant dense<0.000000e+00> : vector<8x128xf32>
    %2 = tpu.matmul %0, %1, %cst {dimension_numbers = #tpu.dot_dimension_numbers<[1], [0], [0], [1], [0, 0, 1, 1], [], []>} : vector<8x16xbf16>, vector<16x128xbf16>, vector<8x128xf32> -> vector<8x128xf32>
    %c0_3 = arith.constant 0 : index
    %c0_4 = arith.constant 0 : index
    %3 = vector.load %arg3[%c0_3, %c0_4] : memref<1x128xf32, #tpu.memory_space<vmem>>, vector<1x128xf32>
    %4 = vector.broadcast %3 : vector<1x128xf32> to vector<8x128xf32>
    %5 = arith.addf %2, %4 : vector<8x128xf32>
    %cst_5 = arith.constant 0.000000e+00 : f32
    %6 = vector.broadcast %cst_5 : f32 to vector<8x128xf32>
    %7 = arith.maximumf %5, %6 : vector<8x128xf32>
    %8 = arith.truncf %7 : vector<8x128xf32> to vector<8x128xbf16>
    %c0_6 = arith.constant 0 : index
    %c0_7 = arith.constant 0 : index
    %9 = vector.load %arg4[%c0_6, %c0_7] : memref<128x128xbf16, #tpu.memory_space<vmem>>, vector<128x128xbf16>
    %cst_8 = arith.constant dense<0.000000e+00> : vector<8x128xf32>
    %10 = tpu.matmul %8, %9, %cst_8 {dimension_numbers = #tpu.dot_dimension_numbers<[1], [0], [0], [1], [0, 0, 1, 1], [], []>} : vector<8x128xbf16>, vector<128x128xbf16>, vector<8x128xf32> -> vector<8x128xf32>
    %c0_9 = arith.constant 0 : index
    %c0_10 = arith.constant 0 : index
    %11 = vector.load %arg5[%c0_9, %c0_10] : memref<1x128xf32, #tpu.memory_space<vmem>>, vector<1x128xf32>
    %12 = vector.broadcast %11 : vector<1x128xf32> to vector<8x128xf32>
    %13 = arith.addf %10, %12 : vector<8x128xf32>
    %cst_11 = arith.constant 0.000000e+00 : f32
    %14 = vector.broadcast %cst_11 : f32 to vector<8x128xf32>
    %15 = arith.maximumf %13, %14 : vector<8x128xf32>
    %16 = arith.truncf %15 : vector<8x128xf32> to vector<8x128xbf16>
    %c0_12 = arith.constant 0 : index
    %c0_13 = arith.constant 0 : index
    %17 = vector.load %arg6[%c0_12, %c0_13] : memref<128x128xbf16, #tpu.memory_space<vmem>>, vector<128x128xbf16>
    %cst_14 = arith.constant dense<0.000000e+00> : vector<8x128xf32>
    %18 = tpu.matmul %16, %17, %cst_14 {dimension_numbers = #tpu.dot_dimension_numbers<[1], [0], [0], [1], [0, 0, 1, 1], [], []>} : vector<8x128xbf16>, vector<128x128xbf16>, vector<8x128xf32> -> vector<8x128xf32>
    %c0_15 = arith.constant 0 : index
    %c0_16 = arith.constant 0 : index
    %19 = vector.load %arg7[%c0_15, %c0_16] : memref<1x128xf32, #tpu.memory_space<vmem>>, vector<1x128xf32>
    %20 = vector.broadcast %19 : vector<1x128xf32> to vector<8x128xf32>
    %21 = arith.addf %18, %20 : vector<8x128xf32>
    %cst_17 = arith.constant 0.000000e+00 : f32
    %22 = vector.broadcast %cst_17 : f32 to vector<8x128xf32>
    %23 = arith.maximumf %21, %22 : vector<8x128xf32>
    %24 = arith.truncf %23 : vector<8x128xf32> to vector<8x128xbf16>
    %c0_18 = arith.constant 0 : index
    %c0_19 = arith.constant 0 : index
    %25 = vector.load %arg8[%c0_18, %c0_19] : memref<128x128xbf16, #tpu.memory_space<vmem>>, vector<128x128xbf16>
    %cst_20 = arith.constant dense<0.000000e+00> : vector<8x128xf32>
    %26 = tpu.matmul %24, %25, %cst_20 {dimension_numbers = #tpu.dot_dimension_numbers<[1], [0], [0], [1], [0, 0, 1, 1], [], []>} : vector<8x128xbf16>, vector<128x128xbf16>, vector<8x128xf32> -> vector<8x128xf32>
    %c0_21 = arith.constant 0 : index
    %c0_22 = arith.constant 0 : index
    %27 = vector.load %arg9[%c0_21, %c0_22] : memref<1x128xf32, #tpu.memory_space<vmem>>, vector<1x128xf32>
    %28 = vector.broadcast %27 : vector<1x128xf32> to vector<8x128xf32>
    %29 = arith.addf %26, %28 : vector<8x128xf32>
    %cst_23 = arith.constant 0.000000e+00 : f32
    %30 = vector.broadcast %cst_23 : f32 to vector<8x128xf32>
    %31 = arith.maximumf %29, %30 : vector<8x128xf32>
    %32 = arith.truncf %31 : vector<8x128xf32> to vector<8x128xbf16>
    %c0_24 = arith.constant 0 : index
    %c0_25 = arith.constant 0 : index
    %33 = vector.load %arg10[%c0_24, %c0_25] : memref<128x8xbf16, #tpu.memory_space<vmem>>, vector<128x8xbf16>
    %cst_26 = arith.constant dense<0.000000e+00> : vector<8x8xf32>
    %34 = tpu.matmul %32, %33, %cst_26 {dimension_numbers = #tpu.dot_dimension_numbers<[1], [0], [0], [1], [0, 0, 1, 1], [], []>} : vector<8x128xbf16>, vector<128x8xbf16>, vector<8x8xf32> -> vector<8x8xf32>
    %c0_27 = arith.constant 0 : index
    %c0_28 = arith.constant 0 : index
    %35 = vector.load %arg11[%c0_27, %c0_28] : memref<1x8xf32, #tpu.memory_space<vmem>>, vector<1x8xf32>
    %36 = vector.broadcast %35 : vector<1x8xf32> to vector<8x8xf32>
    %37 = arith.addf %34, %36 : vector<8x8xf32>
    %cst_29 = arith.constant -1.000000e+02 : f32
    %cst_30 = arith.constant 1.000000e+02 : f32
    %38 = vector.broadcast %cst_29 : f32 to vector<8x8xf32>
    %39 = arith.maximumf %38, %37 : vector<8x8xf32>
    %40 = vector.broadcast %cst_30 : f32 to vector<8x8xf32>
    %41 = arith.minimumf %40, %39 : vector<8x8xf32>
    %c0_31 = arith.constant 0 : index
    %c0_32 = arith.constant 0 : index
    %42 = vector.load %arg12[%c0_31, %c0_32] : memref<8x8xf32, #tpu.memory_space<vmem>>, vector<8x8xf32>
    tpu.vector_store %arg12[%c0_31, %c0_32], %41 {strides = array<i32>} : memref<8x8xf32, #tpu.memory_space<vmem>>, vector<8x8xf32>,
    return
  }
  func.func @transform_0(%arg0: i32) -> (i32, i32) {
    %c0_i32 = arith.constant 0 : i32
    %c0_i32_0 = arith.constant 0 : i32
    return %arg0, %c0_i32 : i32, i32
  }
  func.func @transform_1(%arg0: i32) -> (i32, i32) {
    %c0_i32 = arith.constant 0 : i32
    %c0_i32_0 = arith.constant 0 : i32
    %c0_i32_1 = arith.constant 0 : i32
    return %c0_i32, %c0_i32_0 : i32, i32
  }
  func.func @transform_2(%arg0: i32) -> (i32, i32) {
    %c0_i32 = arith.constant 0 : i32
    %c0_i32_0 = arith.constant 0 : i32
    %c0_i32_1 = arith.constant 0 : i32
    return %c0_i32, %c0_i32_0 : i32, i32
  }
  func.func @transform_3(%arg0: i32) -> (i32, i32) {
    %c0_i32 = arith.constant 0 : i32
    %c0_i32_0 = arith.constant 0 : i32
    %c0_i32_1 = arith.constant 0 : i32
    return %c0_i32, %c0_i32_0 : i32, i32
  }
  func.func @transform_4(%arg0: i32) -> (i32, i32) {
    %c0_i32 = arith.constant 0 : i32
    %c0_i32_0 = arith.constant 0 : i32
    %c0_i32_1 = arith.constant 0 : i32
    return %c0_i32, %c0_i32_0 : i32, i32
  }
  func.func @transform_5(%arg0: i32) -> (i32, i32) {
    %c0_i32 = arith.constant 0 : i32
    %c0_i32_0 = arith.constant 0 : i32
    %c0_i32_1 = arith.constant 0 : i32
    return %c0_i32, %c0_i32_0 : i32, i32
  }
  func.func @transform_6(%arg0: i32) -> (i32, i32) {
    %c0_i32 = arith.constant 0 : i32
    %c0_i32_0 = arith.constant 0 : i32
    %c0_i32_1 = arith.constant 0 : i32
    return %c0_i32, %c0_i32_0 : i32, i32
  }
  func.func @transform_7(%arg0: i32) -> (i32, i32) {
    %c0_i32 = arith.constant 0 : i32
    %c0_i32_0 = arith.constant 0 : i32
    %c0_i32_1 = arith.constant 0 : i32
    return %c0_i32, %c0_i32_0 : i32, i32
  }
  func.func @transform_8(%arg0: i32) -> (i32, i32) {
    %c0_i32 = arith.constant 0 : i32
    %c0_i32_0 = arith.constant 0 : i32
    %c0_i32_1 = arith.constant 0 : i32
    return %c0_i32, %c0_i32_0 : i32, i32
  }
  func.func @transform_9(%arg0: i32) -> (i32, i32) {
    %c0_i32 = arith.constant 0 : i32
    %c0_i32_0 = arith.constant 0 : i32
    %c0_i32_1 = arith.constant 0 : i32
    return %c0_i32, %c0_i32_0 : i32, i32
  }
  func.func @transform_10(%arg0: i32) -> (i32, i32) {
    %c0_i32 = arith.constant 0 : i32
    %c0_i32_0 = arith.constant 0 : i32
    %c0_i32_1 = arith.constant 0 : i32
    return %c0_i32, %c0_i32_0 : i32, i32
  }
  func.func @transform_11(%arg0: i32) -> (i32, i32) {
    %c0_i32 = arith.constant 0 : i32
    %c0_i32_0 = arith.constant 0 : i32
    return %arg0, %c0_i32 : i32, i32
  }
}

</mosaic_0001>

<llo_original>
// kernel: _critic_forward_impl.1
$region0: #{_critic_forward_impl.1}
  #allocation0 [shape = 'u32[]', space=smem, size = 0x4, offset = 0x4, fixed_abs, tag = 'smem constant byte address 0x4 - core index']
  #allocation1 [shape = 'u32[144,128]{1,0:T(1,128)}', space=vmem, size = 0x12000, scoped, tag = 'internal scratch']
  %s0 = inlined_call_operand.vmem [shape: bf16[8,16], index: 0, kind: input, shape index: {}]
  %s1 = inlined_call_operand.vmem [shape: bf16[16,128], index: 1, kind: input, shape index: {}]
  %s2 = inlined_call_operand.vmem [shape: f32[1,128], index: 2, kind: input, shape index: {}]
  %s3 = inlined_call_operand.vmem [shape: bf16[128,128], index: 3, kind: input, shape index: {}]
  %s4 = inlined_call_operand.vmem [shape: f32[1,128], index: 4, kind: input, shape index: {}]
  %s5 = inlined_call_operand.hbm [shape: bf16[128,128], index: 5, kind: input, shape index: {}]
  %s6 = inlined_call_operand.vmem [shape: f32[1,128], index: 6, kind: input, shape index: {}]
  %s7 = inlined_call_operand.hbm [shape: bf16[128,128], index: 7, kind: input, shape index: {}]
  %s8 = inlined_call_operand.vmem [shape: f32[1,128], index: 8, kind: input, shape index: {}]
  %s9 = inlined_call_operand.vmem [shape: bf16[128,8], index: 9, kind: input, shape index: {}]
  %s10 = inlined_call_operand.vmem [shape: f32[1,8], index: 10, kind: input, shape index: {}]
  %s11 = inlined_call_operand.vmem [shape: f32[8,8], index: 11, kind: output, shape index: {}]
  %s12 = sld [smem:[#allocation0]]
  $region62: #{_critic_forward_impl.1} parent=0
    _
  %s14 = ssub.s32 1, %s12
  %s15 = scalar_select 0, %s14, %s12
  $region1: #{_critic_forward_impl.1} parent=0
    #allocation2 [shape = 'u8[32768]{0}', space=vmem, size = 0x8000, scoped, tag = 'input window, operand 5, single buffered']
    #allocation3 [shape = 's32[1]{0}', space=sflag, size = 0x4, scoped, tag = 'scoped memory for _critic_forward_impl.1']
    #allocation4 [shape = 'u8[32768]{0}', space=vmem, size = 0x8000, scoped, tag = 'input window, operand 7, single buffered']
    #allocation5 [shape = 's32[1]{0}', space=sflag, size = 0x4, scoped, tag = 'scoped memory for _critic_forward_impl.1']
    %16 = vsyncpa [#allocation3], 0
    %17 = vsyncpa [#allocation5], 0
    // Predicated region
    $region2: #{_critic_forward_impl.1} parent=1 // pred_check
      _
    $region3: #{_critic_forward_impl.1} parent=1 // pred_check_branch
      %19 = sbr.rel (0) target = $region5
    $region4: #{_critic_forward_impl.1} parent=1 // pred_region
      _
    $region5: #{_critic_forward_impl.1} parent=1 // pred_fallthru
      _
    // Predicated region
    $region6: #{_critic_forward_impl.1} parent=1 // pred_check
      _
    $region7: #{_critic_forward_impl.1} parent=1 // pred_check_branch
      %21 = sbr.rel (0) target = $region9
    $region8: #{_critic_forward_impl.1} parent=1 // pred_region
      _
    $region9: #{_critic_forward_impl.1} parent=1 // pred_fallthru
      _
    // Predicated region
    $region10: #{_critic_forward_impl.1} parent=1 // pred_check
      _
    $region11: #{_critic_forward_impl.1} parent=1 // pred_check_branch
      %23 = sbr.rel (0) target = $region13
    $region12: #{_critic_forward_impl.1} parent=1 // pred_region
      _
    $region13: #{_critic_forward_impl.1} parent=1 // pred_fallthru
      _
    // Predicated region
    $region14: #{_critic_forward_impl.1} parent=1 // pred_check
      _
    $region15: #{_critic_forward_impl.1} parent=1 // pred_check_branch
      %25 = sbr.rel (0) target = $region17
    $region16: #{_critic_forward_impl.1} parent=1 // pred_region
      _
    $region17: #{_critic_forward_impl.1} parent=1 // pred_fallthru
      _
    // Predicated region
    $region18: #{_critic_forward_impl.1} parent=1 // pred_check
      _
    $region19: #{_critic_forward_impl.1} parent=1 // pred_check_branch
      %27 = sbr.rel (0) target = $region21
    $region20: #{_critic_forward_impl.1} parent=1 // pred_region
      _
    $region21: #{_critic_forward_impl.1} parent=1 // pred_fallthru
      _
    // Predicated region
    $region22: #{_critic_forward_impl.1} parent=1 // pred_check
      _
    $region23: #{_critic_forward_impl.1} parent=1 // pred_check_branch
      %29 = sbr.rel (0) target = $region25
    $region24: #{_critic_forward_impl.1} parent=1 // pred_region
      %s31 = ssub.s32 1024, 1024
      %32 = vsyncadd [#allocation3], %s31
      %s33 = sshll.u32 [#allocation2], 4
      %s34 = int_to_ptr.vmem [resolvable:$true] %s33
      %39 = dma.hbm_to_vmem [thread:$0]  %s5, 1024, %s34, [#allocation3], 64, 64, 4
    $region25: #{_critic_forward_impl.1} parent=1 // pred_fallthru
      _
    // Predicated region
    $region26: #{_critic_forward_impl.1} parent=1 // pred_check
      _
    $region27: #{_critic_forward_impl.1} parent=1 // pred_check_branch
      %41 = sbr.rel (0) target = $region29
    $region28: #{_critic_forward_impl.1} parent=1 // pred_region
      _
    $region29: #{_critic_forward_impl.1} parent=1 // pred_fallthru
      _
    // Predicated region
    $region30: #{_critic_forward_impl.1} parent=1 // pred_check
      _
    $region31: #{_critic_forward_impl.1} parent=1 // pred_check_branch
      %43 = sbr.rel (0) target = $region33
    $region32: #{_critic_forward_impl.1} parent=1 // pred_region
      %s45 = ssub.s32 1024, 1024
      %46 = vsyncadd [#allocation5], %s45
      %s47 = sshll.u32 [#allocation4], 4
      %s48 = int_to_ptr.vmem [resolvable:$true] %s47
      %53 = dma.hbm_to_vmem [thread:$0]  %s7, 1024, %s48, [#allocation5], 64, 64, 4
    $region33: #{_critic_forward_impl.1} parent=1 // pred_fallthru
      _
    // Predicated region
    $region34: #{_critic_forward_impl.1} parent=1 // pred_check
      _
    $region35: #{_critic_forward_impl.1} parent=1 // pred_check_branch
      %55 = sbr.rel (0) target = $region37
    $region36: #{_critic_forward_impl.1} parent=1 // pred_region
      _
    $region37: #{_critic_forward_impl.1} parent=1 // pred_fallthru
      _
    // Predicated region
    $region38: #{_critic_forward_impl.1} parent=1 // pred_check
      _
    $region39: #{_critic_forward_impl.1} parent=1 // pred_check_branch
      %57 = sbr.rel (0) target = $region41
    $region40: #{_critic_forward_impl.1} parent=1 // pred_region
      _
    $region41: #{_critic_forward_impl.1} parent=1 // pred_fallthru
      _
    // Predicated region
    $region42: #{_critic_forward_impl.1} parent=1 // pred_check
      _
    $region43: #{_critic_forward_impl.1} parent=1 // pred_check_branch
      %59 = sbr.rel (0) target = $region45
    $region44: #{_critic_forward_impl.1} parent=1 // pred_region
      _
    $region45: #{_critic_forward_impl.1} parent=1 // pred_fallthru
      _
    // Predicated region
    $region46: #{_critic_forward_impl.1} parent=1 // pred_check
      _
    $region47: #{_critic_forward_impl.1} parent=1 // pred_check_branch
      %61 = sbr.rel (0) target = $region49
    $region48: #{_critic_forward_impl.1} parent=1 // pred_region
      %62 = dma.done [#allocation3], 1024
    $region49: #{_critic_forward_impl.1} parent=1 // pred_fallthru
      _
    // Predicated region
    $region50: #{_critic_forward_impl.1} parent=1 // pred_check
      _
    $region51: #{_critic_forward_impl.1} parent=1 // pred_check_branch
      %64 = sbr.rel (0) target = $region53
    $region52: #{_critic_forward_impl.1} parent=1 // pred_region
      %65 = dma.done [#allocation5], 1024
    $region53: #{_critic_forward_impl.1} parent=1 // pred_fallthru
      _
    %v67 = vld [vmem:[%s0] sm:$0xf]
    %v68 = vld [vmem:[%s1] sm:$0xf]
    %v69 = vld [vmem:[%s1 + $0x4] sm:$0xf]
    %v70 = vld [vmem:[%s2] sm:$0x1]
    %v72 = vlaneseq
    %v73 = vshrl.u32 %v72, 7
    %v74 = vsub.s32 0, %v73
    %v75 = vrot.slane %v70, %v74
    %v79 = vunpack.c.l.b16 %v68
    %v80 = vunpack.c.l.b16 %v69
    %v81 = vpack.c.b16 %v80, %v79
    %vm83 = vcmask 130048
    %v85 = vsel %vm83, %v67, 0
    %87 = vmatprep.subr.bf16.mxu0 0
    %88 = vmatpush1.bf16.msra.mxu0 %v81
    %89 = vmatprep.subr.bf16.mxu0 0
    %90 = vmatpush1.bf16.msra.mxu0 0
    %91 = vmatprep.subr.bf16.mxu0 0
    %92 = vmatpush1.bf16.msra.mxu0 0
    %93 = vmatprep.subr.bf16.mxu0 0
    %94 = vmatpush1.bf16.msra.mxu0 0
    %95 = vmatprep.subr.bf16.mxu0 0
    %96 = vmatpush1.bf16.msra.mxu0 0
    %97 = vmatprep.subr.bf16.mxu0 0
    %98 = vmatpush1.bf16.msra.mxu0 0
    %99 = vmatprep.subr.bf16.mxu0 0
    %100 = vmatpush1.bf16.msra.mxu0 0
    %101 = vmatprep.subr.bf16.mxu0 0
    %102 = vmatpush1.bf16.msra.mxu0 0
    %103 = vmatprep.subr.bf16.mxu0 0
    %104 = vmatpush1.bf16.msra.mxu0 0
    %105 = vmatprep.subr.bf16.mxu0 0
    %106 = vmatpush1.bf16.msra.mxu0 0
    %107 = vmatprep.subr.bf16.mxu0 0
    %108 = vmatpush1.bf16.msra.mxu0 0
    %109 = vmatprep.subr.bf16.mxu0 0
    %110 = vmatpush1.bf16.msra.mxu0 0
    %111 = vmatprep.subr.bf16.mxu0 0
    %112 = vmatpush1.bf16.msra.mxu0 0
    %113 = vmatprep.subr.bf16.mxu0 0
    %114 = vmatpush1.bf16.msra.mxu0 0
    %115 = vmatprep.subr.bf16.mxu0 0
    %116 = vmatpush1.bf16.msra.mxu0 0
    %117 = vmatprep.subr.bf16.mxu0 0
    %118 = vmatpush1.bf16.msra.mxu0 0
    %119 = vmatprep.mubr.bf16.mxu0 0
    %120 = vmatmul.mubr.bf16.gmra.mrb[0].mxu0 %v85
    %v121 = vpop.f32.mrb[0].mxu0
    %v122 = vadd.f32 %v75, %v121
    %v123 = vpop.f32.mrb[0].mxu0
    %v124 = vpop.f32.mrb[0].mxu0
    %v125 = vpop.f32.mrb[0].mxu0
    %126 = vdwg.mxu0
    %v127 = vmax.f32 %v122, 0.0
    %v128 = vpack.c.bf16 %v127, %v127
    %v129 = vld [vmem:[%s3] sm:$0xf]
    %v130 = vld [vmem:[%s3 + $0x4] sm:$0xf]
    %v131 = vld [vmem:[%s3 + $0x8] sm:$0xf]
    %v132 = vld [vmem:[%s3 + $0xc] sm:$0xf]
    %v133 = vld [vmem:[%s3 + $0x10] sm:$0xf]
    %v134 = vld [vmem:[%s3 + $0x14] sm:$0xf]
    %v135 = vld [vmem:[%s3 + $0x18] sm:$0xf]
    %v136 = vld [vmem:[%s3 + $0x1c] sm:$0xf]
    %v137 = vld [vmem:[%s3 + $0x20] sm:$0xf]
    %v138 = vld [vmem:[%s3 + $0x24] sm:$0xf]
    %v139 = vld [vmem:[%s3 + $0x28] sm:$0xf]
    %v140 = vld [vmem:[%s3 + $0x2c] sm:$0xf]
    %v141 = vld [vmem:[%s3 + $0x30] sm:$0xf]
    %v142 = vld [vmem:[%s3 + $0x34] sm:$0xf]
    %v143 = vld [vmem:[%s3 + $0x38] sm:$0xf]
    %v144 = vld [vmem:[%s3 + $0x3c] sm:$0xf]
    %v145 = vld [vmem:[%s4] sm:$0x1]
    %v147 = vlaneseq
    %v148 = vshrl.u32 %v147, 7
    %v149 = vsub.s32 0, %v148
    %v150 = vrot.slane %v145, %v149
    %v168 = vunpack.c.l.b16 %v129
    %v169 = vunpack.c.l.b16 %v130
    %v170 = vunpack.c.l.b16 %v131
    %v171 = vunpack.c.l.b16 %v132
    %v172 = vunpack.c.l.b16 %v133
    %v173 = vunpack.c.l.b16 %v134
    %v174 = vunpack.c.l.b16 %v135
    %v175 = vunpack.c.l.b16 %v136
    %v176 = vunpack.c.l.b16 %v137
    %v177 = vunpack.c.l.b16 %v138
    %v178 = vunpack.c.l.b16 %v139
    %v179 = vunpack.c.l.b16 %v140
    %v180 = vunpack.c.l.b16 %v141
    %v181 = vunpack.c.l.b16 %v142
    %v182 = vunpack.c.l.b16 %v143
    %v183 = vunpack.c.l.b16 %v144
    %v184 = vpack.c.b16 %v169, %v168
    %v185 = vpack.c.b16 %v171, %v170
    %v186 = vpack.c.b16 %v173, %v172
    %v187 = vpack.c.b16 %v175, %v174
    %v188 = vpack.c.b16 %v177, %v176
    %v189 = vpack.c.b16 %v179, %v178
    %v190 = vpack.c.b16 %v181, %v180
    %v191 = vpack.c.b16 %v183, %v182
    %200 = vmatprep.subr.bf16.mxu0 0
    %201 = vmatpush1.bf16.msra.mxu0 %v184
    %202 = vmatprep.subr.bf16.mxu0 0
    %203 = vmatpush1.bf16.msra.mxu0 %v185
    %204 = vmatprep.subr.bf16.mxu0 0
    %205 = vmatpush1.bf16.msra.mxu0 %v186
    %206 = vmatprep.subr.bf16.mxu0 0
    %207 = vmatpush1.bf16.msra.mxu0 %v187
    %208 = vmatprep.subr.bf16.mxu0 0
    %209 = vmatpush1.bf16.msra.mxu0 %v188
    %210 = vmatprep.subr.bf16.mxu0 0
    %211 = vmatpush1.bf16.msra.mxu0 %v189
    %212 = vmatprep.subr.bf16.mxu0 0
    %213 = vmatpush1.bf16.msra.mxu0 %v190
    %214 = vmatprep.subr.bf16.mxu0 0
    %215 = vmatpush1.bf16.msra.mxu0 %v191
    %216 = vmatprep.subr.bf16.mxu0 0
    %217 = vmatpush1.bf16.msra.mxu0 0
    %218 = vmatprep.subr.bf16.mxu0 0
    %219 = vmatpush1.bf16.msra.mxu0 0
    %220 = vmatprep.subr.bf16.mxu0 0
    %221 = vmatpush1.bf16.msra.mxu0 0
    %222 = vmatprep.subr.bf16.mxu0 0
    %223 = vmatpush1.bf16.msra.mxu0 0
    %224 = vmatprep.subr.bf16.mxu0 0
    %225 = vmatpush1.bf16.msra.mxu0 0
    %226 = vmatprep.subr.bf16.mxu0 0
    %227 = vmatpush1.bf16.msra.mxu0 0
    %228 = vmatprep.subr.bf16.mxu0 0
    %229 = vmatpush1.bf16.msra.mxu0 0
    %230 = vmatprep.subr.bf16.mxu0 0
    %231 = vmatpush1.bf16.msra.mxu0 0
    %232 = vmatprep.mubr.bf16.mxu0 0
    %233 = vmatmul.mubr.bf16.gmra.mrb[0].mxu0 %v128
    %v234 = vpop.f32.mrb[0].mxu0
    %v235 = vadd.f32 %v150, %v234
    %v236 = vpop.f32.mrb[0].mxu0
    %v237 = vpop.f32.mrb[0].mxu0
    %v238 = vpop.f32.mrb[0].mxu0
    %239 = vdwg.mxu0
    %v240 = vmax.f32 %v235, 0.0
    %v241 = vpack.c.bf16 %v240, %v240
    %v242 = vld [vmem:[#allocation2] sm:$0xf]
    %v243 = vld [vmem:[#allocation2 + $0x4] sm:$0xf]
    %v244 = vld [vmem:[#allocation2 + $0x8] sm:$0xf]
    %v245 = vld [vmem:[#allocation2 + $0xc] sm:$0xf]
    %v246 = vld [vmem:[#allocation2 + $0x10] sm:$0xf]
    %v247 = vld [vmem:[#allocation2 + $0x14] sm:$0xf]
    %v248 = vld [vmem:[#allocation2 + $0x18] sm:$0xf]
    %v249 = vld [vmem:[#allocation2 + $0x1c] sm:$0xf]
    %v250 = vld [vmem:[#allocation2 + $0x20] sm:$0xf]
    %v251 = vld [vmem:[#allocation2 + $0x24] sm:$0xf]
    %v252 = vld [vmem:[#allocation2 + $0x28] sm:$0xf]
    %v253 = vld [vmem:[#allocation2 + $0x2c] sm:$0xf]
    %v254 = vld [vmem:[#allocation2 + $0x30] sm:$0xf]
    %v255 = vld [vmem:[#allocation2 + $0x34] sm:$0xf]
    %v256 = vld [vmem:[#allocation2 + $0x38] sm:$0xf]
    %v257 = vld [vmem:[#allocation2 + $0x3c] sm:$0xf]
    %v258 = vld [vmem:[%s6] sm:$0x1]
    %v260 = vlaneseq
    %v261 = vshrl.u32 %v260, 7
    %v262 = vsub.s32 0, %v261
    %v263 = vrot.slane %v258, %v262
    %v281 = vunpack.c.l.b16 %v242
    %v282 = vunpack.c.l.b16 %v243
    %v283 = vunpack.c.l.b16 %v244
    %v284 = vunpack.c.l.b16 %v245
    %v285 = vunpack.c.l.b16 %v246
    %v286 = vunpack.c.l.b16 %v247
    %v287 = vunpack.c.l.b16 %v248
    %v288 = vunpack.c.l.b16 %v249
    %v289 = vunpack.c.l.b16 %v250
    %v290 = vunpack.c.l.b16 %v251
    %v291 = vunpack.c.l.b16 %v252
    %v292 = vunpack.c.l.b16 %v253
    %v293 = vunpack.c.l.b16 %v254
    %v294 = vunpack.c.l.b16 %v255
    %v295 = vunpack.c.l.b16 %v256
    %v296 = vunpack.c.l.b16 %v257
    %v297 = vpack.c.b16 %v282, %v281
    %v298 = vpack.c.b16 %v284, %v283
    %v299 = vpack.c.b16 %v286, %v285
    %v300 = vpack.c.b16 %v288, %v287
    %v301 = vpack.c.b16 %v290, %v289
    %v302 = vpack.c.b16 %v292, %v291
    %v303 = vpack.c.b16 %v294, %v293
    %v304 = vpack.c.b16 %v296, %v295
    %313 = vmatprep.subr.bf16.mxu0 0
    %314 = vmatpush1.bf16.msra.mxu0 %v297
    %315 = vmatprep.subr.bf16.mxu0 0
    %316 = vmatpush1.bf16.msra.mxu0 %v298
    %317 = vmatprep.subr.bf16.mxu0 0
    %318 = vmatpush1.bf16.msra.mxu0 %v299
    %319 = vmatprep.subr.bf16.mxu0 0
    %320 = vmatpush1.bf16.msra.mxu0 %v300
    %321 = vmatprep.subr.bf16.mxu0 0
    %322 = vmatpush1.bf16.msra.mxu0 %v301
    %323 = vmatprep.subr.bf16.mxu0 0
    %324 = vmatpush1.bf16.msra.mxu0 %v302
    %325 = vmatprep.subr.bf16.mxu0 0
    %326 = vmatpush1.bf16.msra.mxu0 %v303
    %327 = vmatprep.subr.bf16.mxu0 0
    %328 = vmatpush1.bf16.msra.mxu0 %v304
    %329 = vmatprep.subr.bf16.mxu0 0
    %330 = vmatpush1.bf16.msra.mxu0 0
    %331 = vmatprep.subr.bf16.mxu0 0
    %332 = vmatpush1.bf16.msra.mxu0 0
    %333 = vmatprep.subr.bf16.mxu0 0
    %334 = vmatpush1.bf16.msra.mxu0 0
    %335 = vmatprep.subr.bf16.mxu0 0
    %336 = vmatpush1.bf16.msra.mxu0 0
    %337 = vmatprep.subr.bf16.mxu0 0
    %338 = vmatpush1.bf16.msra.mxu0 0
    %339 = vmatprep.subr.bf16.mxu0 0
    %340 = vmatpush1.bf16.msra.mxu0 0
    %341 = vmatprep.subr.bf16.mxu0 0
    %342 = vmatpush1.bf16.msra.mxu0 0
    %343 = vmatprep.subr.bf16.mxu0 0
    %344 = vmatpush1.bf16.msra.mxu0 0
    %345 = vmatprep.mubr.bf16.mxu0 0
    %346 = vmatmul.mubr.bf16.gmra.mrb[0].mxu0 %v241
    %v347 = vpop.f32.mrb[0].mxu0
    %v348 = vadd.f32 %v263, %v347
    %v349 = vpop.f32.mrb[0].mxu0
    %v350 = vpop.f32.mrb[0].mxu0
    %v351 = vpop.f32.mrb[0].mxu0
    %352 = vdwg.mxu0
    %v353 = vmax.f32 %v348, 0.0
    %v354 = vpack.c.bf16 %v353, %v353
    %v355 = vld [vmem:[#allocation4] sm:$0xf]
    %v356 = vld [vmem:[#allocation4 + $0x4] sm:$0xf]
    %v357 = vld [vmem:[#allocation4 + $0x8] sm:$0xf]
    %v358 = vld [vmem:[#allocation4 + $0xc] sm:$0xf]
    %v359 = vld [vmem:[#allocation4 + $0x10] sm:$0xf]
    %v360 = vld [vmem:[#allocation4 + $0x14] sm:$0xf]
    %v361 = vld [vmem:[#allocation4 + $0x18] sm:$0xf]
    %v362 = vld [vmem:[#allocation4 + $0x1c] sm:$0xf]
    %v363 = vld [vmem:[#allocation4 + $0x20] sm:$0xf]
    %v364 = vld [vmem:[#allocation4 + $0x24] sm:$0xf]
    %v365 = vld [vmem:[#allocation4 + $0x28] sm:$0xf]
    %v366 = vld [vmem:[#allocation4 + $0x2c] sm:$0xf]
    %v367 = vld [vmem:[#allocation4 + $0x30] sm:$0xf]
    %v368 = vld [vmem:[#allocation4 + $0x34] sm:$0xf]
    %v369 = vld [vmem:[#allocation4 + $0x38] sm:$0xf]
    %v370 = vld [vmem:[#allocation4 + $0x3c] sm:$0xf]
    %v371 = vld [vmem:[%s8] sm:$0x1]
    %v373 = vlaneseq
    %v374 = vshrl.u32 %v373, 7
    %v375 = vsub.s32 0, %v374
    %v376 = vrot.slane %v371, %v375
    %v394 = vunpack.c.l.b16 %v355
    %v395 = vunpack.c.l.b16 %v356
    %v396 = vunpack.c.l.b16 %v357
    %v397 = vunpack.c.l.b16 %v358
    %v398 = vunpack.c.l.b16 %v359
    %v399 = vunpack.c.l.b16 %v360
    %v400 = vunpack.c.l.b16 %v361
    %v401 = vunpack.c.l.b16 %v362
    %v402 = vunpack.c.l.b16 %v363
    %v403 = vunpack.c.l.b16 %v364
    %v404 = vunpack.c.l.b16 %v365
    %v405 = vunpack.c.l.b16 %v366
    %v406 = vunpack.c.l.b16 %v367
    %v407 = vunpack.c.l.b16 %v368
    %v408 = vunpack.c.l.b16 %v369
    %v409 = vunpack.c.l.b16 %v370
    %v410 = vpack.c.b16 %v395, %v394
    %v411 = vpack.c.b16 %v397, %v396
    %v412 = vpack.c.b16 %v399, %v398
    %v413 = vpack.c.b16 %v401, %v400
    %v414 = vpack.c.b16 %v403, %v402
    %v415 = vpack.c.b16 %v405, %v404
    %v416 = vpack.c.b16 %v407, %v406
    %v417 = vpack.c.b16 %v409, %v408
    %426 = vmatprep.subr.bf16.mxu0 0
    %427 = vmatpush1.bf16.msra.mxu0 %v410
    %428 = vmatprep.subr.bf16.mxu0 0
    %429 = vmatpush1.bf16.msra.mxu0 %v411
    %430 = vmatprep.subr.bf16.mxu0 0
    %431 = vmatpush1.bf16.msra.mxu0 %v412
    %432 = vmatprep.subr.bf16.mxu0 0
    %433 = vmatpush1.bf16.msra.mxu0 %v413
    %434 = vmatprep.subr.bf16.mxu0 0
    %435 = vmatpush1.bf16.msra.mxu0 %v414
    %436 = vmatprep.subr.bf16.mxu0 0
    %437 = vmatpush1.bf16.msra.mxu0 %v415
    %438 = vmatprep.subr.bf16.mxu0 0
    %439 = vmatpush1.bf16.msra.mxu0 %v416
    %440 = vmatprep.subr.bf16.mxu0 0
    %441 = vmatpush1.bf16.msra.mxu0 %v417
    %442 = vmatprep.subr.bf16.mxu0 0
    %443 = vmatpush1.bf16.msra.mxu0 0
    %444 = vmatprep.subr.bf16.mxu0 0
    %445 = vmatpush1.bf16.msra.mxu0 0
    %446 = vmatprep.subr.bf16.mxu0 0
    %447 = vmatpush1.bf16.msra.mxu0 0
    %448 = vmatprep.subr.bf16.mxu0 0
    %449 = vmatpush1.bf16.msra.mxu0 0
    %450 = vmatprep.subr.bf16.mxu0 0
    %451 = vmatpush1.bf16.msra.mxu0 0
    %452 = vmatprep.subr.bf16.mxu0 0
    %453 = vmatpush1.bf16.msra.mxu0 0
    %454 = vmatprep.subr.bf16.mxu0 0
    %455 = vmatpush1.bf16.msra.mxu0 0
    %456 = vmatprep.subr.bf16.mxu0 0
    %457 = vmatpush1.bf16.msra.mxu0 0
    %458 = vmatprep.mubr.bf16.mxu0 0
    %459 = vmatmul.mubr.bf16.gmra.mrb[0].mxu0 %v354
    %v460 = vpop.f32.mrb[0].mxu0
    %v461 = vadd.f32 %v376, %v460
    %v462 = vpop.f32.mrb[0].mxu0
    %v463 = vpop.f32.mrb[0].mxu0
    %v464 = vpop.f32.mrb[0].mxu0
    %465 = vdwg.mxu0
    %v466 = vmax.f32 %v461, 0.0
    %v467 = vpack.c.bf16 %v466, %v466
    %v468 = vld [vmem:[%s9] sm:$0xf]
    %v469 = vld [vmem:[%s9 + $0x4] sm:$0xf]
    %v470 = vld [vmem:[%s9 + $0x8] sm:$0xf]
    %v471 = vld [vmem:[%s9 + $0xc] sm:$0xf]
    %v472 = vld [vmem:[%s9 + $0x10] sm:$0xf]
    %v473 = vld [vmem:[%s9 + $0x14] sm:$0xf]
    %v474 = vld [vmem:[%s9 + $0x18] sm:$0xf]
    %v475 = vld [vmem:[%s9 + $0x1c] sm:$0xf]
    %v476 = vld [vmem:[%s9 + $0x20] sm:$0xf]
    %v477 = vld [vmem:[%s9 + $0x24] sm:$0xf]
    %v478 = vld [vmem:[%s9 + $0x28] sm:$0xf]
    %v479 = vld [vmem:[%s9 + $0x2c] sm:$0xf]
    %v480 = vld [vmem:[%s9 + $0x30] sm:$0xf]
    %v481 = vld [vmem:[%s9 + $0x34] sm:$0xf]
    %v482 = vld [vmem:[%s9 + $0x38] sm:$0xf]
    %v483 = vld [vmem:[%s9 + $0x3c] sm:$0xf]
    %v484 = vld [vmem:[%s10] sm:$0x1]
    %v486 = vlaneseq
    %v487 = vshrl.u32 %v486, 7
    %v488 = vsub.s32 0, %v487
    %v489 = vrot.slane %v484, %v488
    %v507 = vunpack.c.l.b16 %v468
    %v508 = vunpack.c.l.b16 %v469
    %v509 = vunpack.c.l.b16 %v470
    %v510 = vunpack.c.l.b16 %v471
    %v511 = vunpack.c.l.b16 %v472
    %v512 = vunpack.c.l.b16 %v473
    %v513 = vunpack.c.l.b16 %v474
    %v514 = vunpack.c.l.b16 %v475
    %v515 = vunpack.c.l.b16 %v476
    %v516 = vunpack.c.l.b16 %v477
    %v517 = vunpack.c.l.b16 %v478
    %v518 = vunpack.c.l.b16 %v479
    %v519 = vunpack.c.l.b16 %v480
    %v520 = vunpack.c.l.b16 %v481
    %v521 = vunpack.c.l.b16 %v482
    %v522 = vunpack.c.l.b16 %v483
    %v523 = vpack.c.b16 %v508, %v507
    %v524 = vpack.c.b16 %v510, %v509
    %v525 = vpack.c.b16 %v512, %v511
    %v526 = vpack.c.b16 %v514, %v513
    %v527 = vpack.c.b16 %v516, %v515
    %v528 = vpack.c.b16 %v518, %v517
    %v529 = vpack.c.b16 %v520, %v519
    %v530 = vpack.c.b16 %v522, %v521
    %539 = vmatprep.subr.bf16.mxu0 0
    %540 = vmatpush1.bf16.msra.mxu0 %v523
    %541 = vmatprep.subr.bf16.mxu0 0
    %542 = vmatpush1.bf16.msra.mxu0 %v524
    %543 = vmatprep.subr.bf16.mxu0 0
    %544 = vmatpush1.bf16.msra.mxu0 %v525
    %545 = vmatprep.subr.bf16.mxu0 0
    %546 = vmatpush1.bf16.msra.mxu0 %v526
    %547 = vmatprep.subr.bf16.mxu0 0
    %548 = vmatpush1.bf16.msra.mxu0 %v527
    %549 = vmatprep.subr.bf16.mxu0 0
    %550 = vmatpush1.bf16.msra.mxu0 %v528
    %551 = vmatprep.subr.bf16.mxu0 0
    %552 = vmatpush1.bf16.msra.mxu0 %v529
    %553 = vmatprep.subr.bf16.mxu0 0
    %554 = vmatpush1.bf16.msra.mxu0 %v530
    %555 = vmatprep.subr.bf16.mxu0 0
    %556 = vmatpush1.bf16.msra.mxu0 0
    %557 = vmatprep.subr.bf16.mxu0 0
    %558 = vmatpush1.bf16.msra.mxu0 0
    %559 = vmatprep.subr.bf16.mxu0 0
    %560 = vmatpush1.bf16.msra.mxu0 0
    %561 = vmatprep.subr.bf16.mxu0 0
    %562 = vmatpush1.bf16.msra.mxu0 0
    %563 = vmatprep.subr.bf16.mxu0 0
    %564 = vmatpush1.bf16.msra.mxu0 0
    %565 = vmatprep.subr.bf16.mxu0 0
    %566 = vmatpush1.bf16.msra.mxu0 0
    %567 = vmatprep.subr.bf16.mxu0 0
    %568 = vmatpush1.bf16.msra.mxu0 0
    %569 = vmatprep.subr.bf16.mxu0 0
    %570 = vmatpush1.bf16.msra.mxu0 0
    %571 = vmatprep.mubr.bf16.mxu0 0
    %572 = vmatmul.mubr.bf16.gmra.mrb[0].mxu0 %v467
    %v573 = vpop.f32.mrb[0].mxu0
    %v574 = vadd.f32 %v489, %v573
    %v575 = vpop.f32.mrb[0].mxu0
    %v576 = vpop.f32.mrb[0].mxu0
    %v577 = vpop.f32.mrb[0].mxu0
    %578 = vdwg.mxu0
    %v579 = vmax.f32 %v574, -100.0
    %v580 = vmin.f32 %v579, 100.0
    %vm581 = vcmask 64512
    %582 = vst.msk [vmem:[%s11] sm:$0xff] %vm581, %v580
    // Predicated region
    $region54: #{_critic_forward_impl.1} parent=1 // pred_check
      _
    $region55: #{_critic_forward_impl.1} parent=1 // pred_check_branch
      %584 = sbr.rel (0) target = $region57
    $region56: #{_critic_forward_impl.1} parent=1 // pred_region
      _
    $region57: #{_critic_forward_impl.1} parent=1 // pred_fallthru
      _
    // Predicated region
    $region58: #{_critic_forward_impl.1} parent=1 // pred_check
      _
    $region59: #{_critic_forward_impl.1} parent=1 // pred_check_branch
      %586 = sbr.rel (0) target = $region61
    $region60: #{_critic_forward_impl.1} parent=1 // pred_region
      _
    $region61: #{_critic_forward_impl.1} parent=1 // pred_fallthru
      _
    %587 = vsyncpa [#allocation3], 1
    %588 = vsyncpa [#allocation5], 1

</llo_original>
